<compile_context>
chip_gen: v5e
topology: v5e:2x2
jax: 0.10.0
libtpu: 0.0.40
codegen_flags: <defaults>
</compile_context>

<pallas_src>
import jax
import jax.numpy as jnp
from jax.experimental import pallas as pl
from jax.experimental.pallas import tpu as pltpu

LANE = 128


def _zrelu_kernel(x_ref, o_ref):
    # x_ref / o_ref: (1, 2, R, C) VMEM tiles; dim 1 = [real, imag].
    real = x_ref[:, 0, :, :]
    imag = x_ref[:, 1, :, :]
    cond = jnp.logical_and(real > 0, imag > 0)
    zero = jnp.zeros((), dtype=o_ref.dtype)
    o_ref[:, 0, :, :] = jnp.where(cond, real, zero)
    o_ref[:, 1, :, :] = jnp.where(cond, imag, zero)


def _device_tuning():
    """Return (target_half_block_bytes, vmem_limit_bytes or None) per TPU gen."""
    try:
        kind = jax.devices()[0].device_kind.lower()
    except Exception:
        kind = ""
    if "v7" in kind:
        # 3 MiB half-block -> 24 MiB double-buffered in+out; 64 MiB physical VMEM.
        return 3 << 20, 48 << 20
    if "v6" in kind:
        # 2 MiB half-block -> 16 MiB, under the 32 MiB default scoped limit.
        return 2 << 20, None
    # v5e / unknown: 1 MiB half-block -> 8 MiB, under the 16 MiB default.
    return 1 << 20, None


def _run_tiled(xr, half_block_bytes, cparams_kwargs):
    """Run the kernel on a lane-dense (N, 2, K, 128) view."""
    N, _, K, lane = xr.shape
    itemsize = jnp.dtype(xr.dtype).itemsize
    packmult = max(8, 32 // itemsize)  # 8 f32 / 16 bf16 / 32 int8 sublane packing
    tk_target = max(
        packmult, (half_block_bytes // (lane * itemsize)) // packmult * packmult
    )
    TK = K if K <= tk_target else tk_target
    GK = pl.cdiv(K, TK)

    # Collapse (N, GK) into one parallel axis: even megacore split on v7x even
    # when N is 1 or odd.
    def idx_map(g):
        return (g // GK, 0, g % GK, 0)

    return pl.pallas_call(
        _zrelu_kernel,
        out_shape=jax.ShapeDtypeStruct((N, 2, K, lane), xr.dtype),
        grid=(N * GK,),
        in_specs=[pl.BlockSpec((1, 2, TK, lane), idx_map)],
        out_specs=pl.BlockSpec((1, 2, TK, lane), idx_map),
        compiler_params=pltpu.CompilerParams(**cparams_kwargs),
    )(xr)


def zrelu1d(x):
    """ZReLU for complex-as-stacked-channels input of shape (N, C, L)."""
    N, C, L = x.shape
    assert C % 2 == 0, "channel dim must be even (real/imag halves)"
    H = C // 2
    M = H * L
    itemsize = jnp.dtype(x.dtype).itemsize

    half_block_bytes, vmem_limit = _device_tuning()
    cparams = dict(dimension_semantics=("parallel",))
    if vmem_limit is not None:
        cparams["vmem_limit_bytes"] = vmem_limit

    xh = x.reshape(N, 2, H, L)  # free contiguous view; dim 1 = [real, imag]

    if M % LANE == 0:
        # Lane-dense streaming path: flatten each half to (K, 128) rows.
        out = _run_tiled(xh.reshape(N, 2, M // LANE, LANE), half_block_bytes, cparams)
        return out.reshape(N, C, L)

    # Non-128-aligned H*L: process one whole (2, H, L) slab per grid step
    # (block == full array extent on the last two dims is always legal),
    # avoiding pad + slice round-trips through HBM.
    slab_bytes = 2 * M * itemsize
    if slab_bytes <= 4 * half_block_bytes:
        slab_spec = pl.BlockSpec((1, 2, H, L), lambda n: (n, 0, 0, 0))
        out = pl.pallas_call(
            _zrelu_kernel,
            out_shape=jax.ShapeDtypeStruct((N, 2, H, L), x.dtype),
            grid=(N,),
            in_specs=[slab_spec],
            out_specs=slab_spec,
            compiler_params=pltpu.CompilerParams(**cparams),
        )(xh)
        return out.reshape(N, C, L)

    # Fallback for huge, non-128-aligned slabs: pad to lane width (one extra
    # copy each way, but keeps full-lane stores inside the kernel).
    K = pl.cdiv(M, LANE)
    M_pad = K * LANE
    xp = jnp.pad(xh.reshape(N, 2, M), ((0, 0), (0, 0), (0, M_pad - M)))
    out = _run_tiled(xp.reshape(N, 2, K, LANE), half_block_bytes, cparams)
    return out.reshape(N, 2, M_pad)[:, :, :M].reshape(N, C, L)


def zrelu1d_ref(x):
    # Pure-JAX reference mirroring the PyTorch module.
    half = x.shape[1] // 2
    real, imag = x[:, :half, :], x[:, half:, :]
    cond = jnp.logical_and(real > 0, imag > 0)
    out_real = jnp.where(cond, real, jnp.zeros_like(real))
    out_imag = jnp.where(cond, imag, jnp.zeros_like(imag))
    return jnp.concatenate([out_real, out_imag], axis=1)


if __name__ == "__main__":
    key = jax.random.PRNGKey(0)
    k1, k2 = jax.random.split(key)

    # (batch=2, channels=8 -> 4 real + 4 imag, length=16): non-128-aligned
    # H*L -> whole-slab path (no padding passes).
    x1 = jax.random.normal(k1, (2, 8, 16), dtype=jnp.float32)
    out1 = jax.block_until_ready(zrelu1d(x1))
    assert out1.shape == x1.shape and out1.dtype == x1.dtype
    assert jnp.allclose(out1, zrelu1d_ref(x1)), "mismatch vs reference (case 1)"

    # Lane-aligned case: pure reshape, tiled lane-dense path.
    x2 = jax.random.normal(k2, (2, 4, 128), dtype=jnp.float32)
    out2 = jax.block_until_ready(zrelu1d(x2))
    assert out2.shape == x2.shape and out2.dtype == x2.dtype
    assert jnp.allclose(out2, zrelu1d_ref(x2)), "mismatch vs reference (case 2)"

    print("KERNEL_OK")
</pallas_src>

<mosaic_0001>
module attributes {stable_mosaic.version = 11 : i64} {
  func.func @_zrelu_kernel(%arg0: i32, %arg1: memref<1x2x4x16xf32, #tpu.memory_space<vmem>>, %arg2: memref<1x2x4x16xf32, #tpu.memory_space<vmem>>) attributes {dimension_semantics = [#tpu.dimension_semantics<parallel>], iteration_bounds = array<i64: 2>, scalar_prefetch = 0 : i64, scratch_operands = 0 : i64, tpu.core_type = #tpu.core_type<tc>, window_params = [{transform_indices = @transform_0, window_bounds = array<i64: 1, 2, 4, 16>}, {transform_indices = @transform_1, window_bounds = array<i64: 1, 2, 4, 16>}]} {
    %c0 = arith.constant 0 : index
    %c0_0 = arith.constant 0 : index
    %c0_1 = arith.constant 0 : index
    %c0_2 = arith.constant 0 : index
    %0 = vector.load %arg1[%c0, %c0_0, %c0_1, %c0_2] : memref<1x2x4x16xf32, #tpu.memory_space<vmem>>, vector<1x1x4x16xf32>
    %1 = vector.shape_cast %0 : vector<1x1x4x16xf32> to vector<1x4x16xf32>
    %c0_3 = arith.constant 0 : index
    %c1 = arith.constant 1 : index
    %c0_4 = arith.constant 0 : index
    %c0_5 = arith.constant 0 : index
    %2 = vector.load %arg1[%c0_3, %c1, %c0_4, %c0_5] : memref<1x2x4x16xf32, #tpu.memory_space<vmem>>, vector<1x1x4x16xf32>
    %3 = vector.shape_cast %2 : vector<1x1x4x16xf32> to vector<1x4x16xf32>
    %cst = arith.constant 0.000000e+00 : f32
    %4 = vector.broadcast %cst : f32 to vector<1x4x16xf32>
    %5 = arith.cmpf ogt, %1, %4 : vector<1x4x16xf32>
    %cst_6 = arith.constant 0.000000e+00 : f32
    %6 = vector.broadcast %cst_6 : f32 to vector<1x4x16xf32>
    %7 = arith.cmpf ogt, %3, %6 : vector<1x4x16xf32>
    %8 = arith.andi %5, %7 : vector<1x4x16xi1>
    %cst_7 = arith.constant 0.000000e+00 : f32
    %9 = vector.broadcast %cst_7 : f32 to vector<1x4x16xf32>
    %10 = arith.select %8, %1, %9 : vector<1x4x16xi1>, vector<1x4x16xf32>
    %c0_8 = arith.constant 0 : index
    %c0_9 = arith.constant 0 : index
    %c0_10 = arith.constant 0 : index
    %c0_11 = arith.constant 0 : index
    %11 = vector.load %arg2[%c0_8, %c0_9, %c0_10, %c0_11] : memref<1x2x4x16xf32, #tpu.memory_space<vmem>>, vector<1x1x4x16xf32>
    %12 = vector.shape_cast %11 : vector<1x1x4x16xf32> to vector<1x4x16xf32>
    %13 = vector.shape_cast %10 : vector<1x4x16xf32> to vector<1x1x4x16xf32>
    tpu.vector_store %arg2[%c0_8, %c0_9, %c0_10, %c0_11], %13 {strides = array<i32>} : memref<1x2x4x16xf32, #tpu.memory_space<vmem>>, vector<1x1x4x16xf32>,
    %cst_12 = arith.constant 0.000000e+00 : f32
    %14 = vector.broadcast %cst_12 : f32 to vector<1x4x16xf32>
    %15 = arith.select %8, %3, %14 : vector<1x4x16xi1>, vector<1x4x16xf32>
    %c0_13 = arith.constant 0 : index
    %c1_14 = arith.constant 1 : index
    %c0_15 = arith.constant 0 : index
    %c0_16 = arith.constant 0 : index
    %16 = vector.load %arg2[%c0_13, %c1_14, %c0_15, %c0_16] : memref<1x2x4x16xf32, #tpu.memory_space<vmem>>, vector<1x1x4x16xf32>
    %17 = vector.shape_cast %16 : vector<1x1x4x16xf32> to vector<1x4x16xf32>
    %18 = vector.shape_cast %15 : vector<1x4x16xf32> to vector<1x1x4x16xf32>
    tpu.vector_store %arg2[%c0_13, %c1_14, %c0_15, %c0_16], %18 {strides = array<i32>} : memref<1x2x4x16xf32, #tpu.memory_space<vmem>>, vector<1x1x4x16xf32>,
    return
  }
  func.func @transform_0(%arg0: i32) -> (i32, i32, i32, i32) {
    %c0_i32 = arith.constant 0 : i32
    %c0_i32_0 = arith.constant 0 : i32
    %c0_i32_1 = arith.constant 0 : i32
    %c0_i32_2 = arith.constant 0 : i32
    return %arg0, %c0_i32, %c0_i32_0, %c0_i32_1 : i32, i32, i32, i32
  }
  func.func @transform_1(%arg0: i32) -> (i32, i32, i32, i32) {
    %c0_i32 = arith.constant 0 : i32
    %c0_i32_0 = arith.constant 0 : i32
    %c0_i32_1 = arith.constant 0 : i32
    %c0_i32_2 = arith.constant 0 : i32
    return %arg0, %c0_i32, %c0_i32_0, %c0_i32_1 : i32, i32, i32, i32
  }
}

</mosaic_0001>

<llo_original>
// kernel: tpu_custom_call.1
$region0: #{tpu_custom_call.1}
  #allocation0 [shape = 'u32[]', space=smem, size = 0x4, offset = 0x4, fixed_abs, tag = 'smem constant byte address 0x4 - core index']
  #allocation1 [shape = 'u32[72,128]{1,0:T(1,128)}', space=vmem, size = 0x9000, scoped, tag = 'internal scratch']
  %s0 = inlined_call_operand.hbm [shape: f32[2,2,4,16], index: 0, kind: input, shape index: {}]
  %s1 = inlined_call_operand.hbm [shape: f32[2,2,4,16], index: 1, kind: output, shape index: {}]
  %s2 = sld [smem:[#allocation0]]
  $region41: #{tpu_custom_call.1} parent=0
    _
  %s4 = ssub.s32 1, %s2
  %s5 = scalar_select 0, %s4, %s2
  $region1: #{tpu_custom_call.1} parent=0
    #allocation2 [shape = 'u8[8192]{0}', space=vmem, size = 0x2000, scoped, tag = 'input window, operand 0']
    #allocation3 [shape = 's32[2]{0}', space=sflag, size = 0x8, scoped, tag = 'scoped memory for tpu_custom_call.1']
    #allocation4 [shape = 's32[2]{0}', space=sflag, size = 0x8, scoped, tag = 'scoped memory for tpu_custom_call.1']
    #allocation5 [shape = 'u8[8192]{0}', space=vmem, size = 0x2000, scoped, tag = 'output window, operand 0']
    %6 = vsyncpa [#allocation3], 0
    %s7 = scalar_lea.sflag [#allocation3], 1
    %8 = vsyncpa %s7, 0
    %9 = vsyncpa [#allocation4], 0
    %s10 = scalar_lea.sflag [#allocation4], 1
    %11 = vsyncpa %s10, 0
    loop: start=0, step=1, limit=4
    $region2: #{tpu_custom_call.1} parent=1 // loop_pre_header
      _
    $region3: #{tpu_custom_call.1} parent=1 // loop_header
      %s13 = sphi 0, %s17
      %p14 = scmp.ge.s32.totalorder %s13, 4
      %s23 = sphi 0, %s25
      %s26 = sphi 0, %s23
      %s27 = sphi 0, %s26
      %s43 = sphi 0, %s27
      %s49 = sphi 0, %s51
      %s52 = sphi 0, %s49
      %s53 = sphi 0, %s52
      %s69 = sphi 0, %s53
    $region4: #{tpu_custom_call.1} parent=1 // loop_header_branch
      %16 = sbr.rel (%p14) target = $region8
    $region5: #{tpu_custom_call.1} parent=1 // loop_body
      %s18 = ssub.s32 %s13, 1
      %s19 = ssub.s32 %s13, 2
      %s20 = sadd.s32 %s13, 1
      %s21 = ssub.s32 %s13, %s20
      %p22 = scmp.eq.s32.totalorder %s21, 0
      %s24 = sadd.s32 %s23, 1
      %s25 = scalar_select %p22, %s23, %s24
      %p28 = pneg %p22
      %p29 = scmp.eq.s32.totalorder %s13, 1
      %p30 = por %p28, %p29
      %p31 = scmp.ne.s32.totalorder %s23, %s26
      %p32 = scmp.eq.s32.totalorder %s13, 0
      %p33 = por %p31, %p32
      %p34 = scmp.ne.s32.totalorder %s23, %s26
      %p35 = scmp.eq.s32.totalorder %s18, 1
      %p36 = por %p34, %p35
      %p37 = scmp.ne.s32.totalorder %s26, %s27
      %p38 = scmp.eq.s32.totalorder %s18, 0
      %p39 = por %p37, %p38
      %p40 = scmp.ne.s32.totalorder %s26, %s27
      %p41 = scmp.eq.s32.totalorder %s19, 1
      %p42 = por %p40, %p41
      %p44 = scmp.ne.s32.totalorder %s27, %s43
      %p45 = scmp.eq.s32.totalorder %s19, 0
      %p46 = por %p44, %p45
      %s47 = ssub.s32 %s13, %s20
      %p48 = scmp.eq.s32.totalorder %s47, 0
      %s50 = sadd.s32 %s49, 1
      %s51 = scalar_select %p48, %s49, %s50
      %p54 = pneg %p48
      %p55 = scmp.eq.s32.totalorder %s13, 1
      %p56 = por %p54, %p55
      %p57 = scmp.ne.s32.totalorder %s49, %s52
      %p58 = scmp.eq.s32.totalorder %s13, 0
      %p59 = por %p57, %p58
      %p60 = scmp.ne.s32.totalorder %s49, %s52
      %p61 = scmp.eq.s32.totalorder %s18, 1
      %p62 = por %p60, %p61
      %p63 = scmp.ne.s32.totalorder %s52, %s53
      %p64 = scmp.eq.s32.totalorder %s18, 0
      %p65 = por %p63, %p64
      %p66 = scmp.ne.s32.totalorder %s52, %s53
      %p67 = scmp.eq.s32.totalorder %s19, 1
      %p68 = por %p66, %p67
      %p70 = scmp.ne.s32.totalorder %s53, %s69
      %p71 = scmp.eq.s32.totalorder %s19, 0
      %p72 = por %p70, %p71
      %p73 = scmp.le.s32.totalorder 1, %s13
      %p74 = scmp.lt.s32.totalorder %s13, 3
      %p75 = pnand %p73, %p74
      %p76 = pneg %p75
      // Predicated region
      $region9: #{tpu_custom_call.1} parent=5 // pred_check
        _
      $region10: #{tpu_custom_call.1} parent=5 // pred_check_branch
        %78 = sbr.rel (%p75) target = $region12
      $region11: #{tpu_custom_call.1} parent=5 // pred_region
        %s79 = ssub.s32 %s13, 1
      $region12: #{tpu_custom_call.1} parent=5 // pred_fallthru
        _
      %p80 = scmp.lt.s32.totalorder %s13, 2
      // Predicated region
      $region13: #{tpu_custom_call.1} parent=5 // pred_check
        %p81 = pneg %p80
      $region14: #{tpu_custom_call.1} parent=5 // pred_check_branch
        %83 = sbr.rel (%p81) target = $region16
      $region15: #{tpu_custom_call.1} parent=5 // pred_region
        // Predicated region
        $region17: #{tpu_custom_call.1} parent=15 // pred_check
          %p84 = pneg %p33
        $region18: #{tpu_custom_call.1} parent=15 // pred_check_branch
          %86 = sbr.rel (%p84) target = $region20
        $region19: #{tpu_custom_call.1} parent=15 // pred_region
          %s87 = sand.u32 %s23, 1
          %s88 = scalar_lea.sflag [#allocation3], %s87
          %s89 = sand.u32 %s23, 1
          %s90 = smul.addr %s89, 8
          %s91 = scalar_lea.vmem [#allocation2], %s90
          %93 = vsyncadd %s88, 0
          %s94 = smul.addr %s13, 2
          %s95 = smul.addr %s94, 4
          %s96 = scalar_lea.hbm %s0, %s95
          %s97 = sshll.u32 %s96, 4
          %s98 = int_to_ptr.hbm [resolvable:$true] %s97
          %s99 = sshll.u32 %s91, 4
          %s100 = int_to_ptr.vmem [resolvable:$true] %s99
          %105 = dma.hbm_to_vmem [thread:$0]  %s98, 128, %s100, %s88, 64, 64, 4
        $region20: #{tpu_custom_call.1} parent=15 // pred_fallthru
          _
      $region16: #{tpu_custom_call.1} parent=5 // pred_fallthru
        _
      %p106 = scmp.le.s32.totalorder 1, %s13
      %p107 = scmp.lt.s32.totalorder %s13, 3
      %p108 = pnand %p106, %p107
      %p109 = pneg %p108
      // Predicated region
      $region21: #{tpu_custom_call.1} parent=5 // pred_check
        _
      $region22: #{tpu_custom_call.1} parent=5 // pred_check_branch
        %111 = sbr.rel (%p108) target = $region24
      $region23: #{tpu_custom_call.1} parent=5 // pred_region
        %s112 = ssub.s32 %s13, 1
        %s113 = sand.u32 %s26, 1
        %s114 = scalar_lea.sflag [#allocation3], %s113
        %s115 = sand.u32 %s26, 1
        %s116 = smul.addr %s115, 8
        %s117 = scalar_lea.vmem [#allocation2], %s116
        // Predicated region
        $region25: #{tpu_custom_call.1} parent=23 // pred_check
          %p118 = pneg %p39
        $region26: #{tpu_custom_call.1} parent=23 // pred_check_branch
          %120 = sbr.rel (%p118) target = $region28
        $region27: #{tpu_custom_call.1} parent=23 // pred_region
          %122 = dma.done %s114, 128
        $region28: #{tpu_custom_call.1} parent=23 // pred_fallthru
          _
        %s123 = sand.u32 %s26, 1
        %s124 = scalar_lea.sflag [#allocation3], %s123
        %s125 = sand.u32 %s26, 1
        %s126 = smul.addr %s125, 8
        %s127 = scalar_lea.vmem [#allocation2], %s126
        %p128 = pneg %p39
        %p129 = pneg %p36
        %p130 = pneg %p65
        %p131 = pneg %p62
        %s132 = sand.u32 %s52, 1
        %s133 = scalar_lea.sflag [#allocation4], %s132
        %s134 = sand.u32 %s52, 1
        %s135 = smul.addr %s134, 8
        %s136 = scalar_lea.vmem [#allocation5], %s135
        %v137 = vld [vmem:[%s117] sm:$0xf]
        %s138 = scalar_lea.vmem %s117, 4 [#allocation2]
        %v139 = vld [vmem:[%s138] sm:$0xf]
        %vm140 = vcmp.gt.f32.partialorder %v137, 0.0
        %vm141 = vcmp.gt.f32.partialorder %v139, 0.0
        %vm142 = vmand %vm140, %vm141
        %v143 = vsel %vm142, %v137, 0.0
        %vm144 = vcmask 125952
        %145 = vst.msk [vmem:[%s136] sm:$0xf] %vm144, %v143
        %v146 = vsel %vm142, %v139, 0.0
        %s147 = scalar_lea.vmem %s136, 4 [#allocation5]
        %148 = vst.msk [vmem:[%s147] sm:$0xf] %vm144, %v146
        %s149 = sand.u32 %s52, 1
        %s150 = scalar_lea.sflag [#allocation4], %s149
        %s151 = sand.u32 %s52, 1
        %s152 = smul.addr %s151, 8
        %s153 = scalar_lea.vmem [#allocation5], %s152
        // Predicated region
        $region29: #{tpu_custom_call.1} parent=23 // pred_check
          %p154 = pneg %p62
        $region30: #{tpu_custom_call.1} parent=23 // pred_check_branch
          %156 = sbr.rel (%p154) target = $region32
        $region31: #{tpu_custom_call.1} parent=23 // pred_region
          %158 = vsyncadd %s150, 0
          %s159 = smul.addr %s18, 2
          %s160 = smul.addr %s159, 4
          %s161 = scalar_lea.hbm %s1, %s160
          %s162 = sshll.u32 %s153, 4
          %s163 = int_to_ptr.vmem [resolvable:$true] %s162
          %s164 = sshll.u32 %s161, 4
          %s165 = int_to_ptr.hbm [resolvable:$true] %s164
          %170 = dma.vmem_to_hbm [thread:$0]  %s163, 128, %s165, %s150, 64, 64, 4
        $region32: #{tpu_custom_call.1} parent=23 // pred_fallthru
          _
      $region24: #{tpu_custom_call.1} parent=5 // pred_fallthru
        _
      %p171 = scmp.le.s32.totalorder 2, %s13
      // Predicated region
      $region33: #{tpu_custom_call.1} parent=5 // pred_check
        %p172 = pneg %p171
      $region34: #{tpu_custom_call.1} parent=5 // pred_check_branch
        %174 = sbr.rel (%p172) target = $region36
      $region35: #{tpu_custom_call.1} parent=5 // pred_region
        %s175 = ssub.s32 %s13, 2
        // Predicated region
        $region37: #{tpu_custom_call.1} parent=35 // pred_check
          %p176 = pneg %p68
        $region38: #{tpu_custom_call.1} parent=35 // pred_check_branch
          %178 = sbr.rel (%p176) target = $region40
        $region39: #{tpu_custom_call.1} parent=35 // pred_region
          %s179 = sand.u32 %s53, 1
          %s180 = scalar_lea.sflag [#allocation4], %s179
          %s181 = sand.u32 %s53, 1
          %s182 = smul.addr %s181, 8
          %s183 = scalar_lea.vmem [#allocation5], %s182
          %185 = dma.done %s180, 128
        $region40: #{tpu_custom_call.1} parent=35 // pred_fallthru
          _
      $region36: #{tpu_custom_call.1} parent=5 // pred_fallthru
        _
    $region6: #{tpu_custom_call.1} parent=1 // loop_footer
      %s17 = sadd.s32 1, %s13
    $region7: #{tpu_custom_call.1} parent=1 // loop_footer_branch
      %12 = sbr.rel target = $region3
    $region8: #{tpu_custom_call.1} parent=1 // loop_exit
      _
    %186 = vsyncpa [#allocation3], 1
    %s187 = scalar_lea.sflag [#allocation3], 1
    %188 = vsyncpa %s187, 1
    %189 = vsyncpa [#allocation4], 1
    %s190 = scalar_lea.sflag [#allocation4], 1
    %191 = vsyncpa %s190, 1

</llo_original>
